<compile_context>
chip_gen: v6e
topology: v6e:2x2x1
jax: 0.10.0
libtpu: 0.0.40
codegen_flags: <defaults>
</compile_context>

<pallas_src>
import math

import jax
import jax.numpy as jnp
from jax import lax
from jax.experimental import pallas as pl
from jax.experimental.pallas import tpu as pltpu


def _gelu_tanh(x):
    c = math.sqrt(2.0 / math.pi)
    return 0.5 * x * (1.0 + jnp.tanh(c * (x + 0.044715 * x * x * x)))


def _sfno_kernel(xm_ref, wr_ref, wi_ref, wlt_ref, cb_ref, or_ref, oi_ref):
    # xm_ref : [TB, M, C]  truncated modes, channel-last (compute dtype)
    # wr_ref : [M, C, C]   weights_real as (mode, in_ch, out_ch)
    # wi_ref : [M, C, C]
    # wlt_ref: [C, C]      nn.Linear weight transposed -> (in_ch, out_ch)
    # cb_ref : [M, C]      precomputed (W_lin @ bias[:, :M]).T + b_lin   (f32)
    # or_ref : [M, TB, C]  real part of the first M coefficients (f32)
    # oi_ref : [M, TB, C]  imag part
    xm = xm_ref[...]

    # Spectral conv on the MXU, batched over the mode axis:
    #   y[m, b, j] = sum_i x[b, m, i] * W[m, i, j]
    dn = (((2,), (1,)), ((1,), (0,)))
    yr = lax.dot_general(xm, wr_ref[...], dn,
                         preferred_element_type=jnp.float32)   # [M, TB, C]
    yi = lax.dot_general(xm, wi_ref[...], dn,
                         preferred_element_type=jnp.float32)   # [M, TB, C]

    m, tb, c = yr.shape
    wlt = wlt_ref[...]

    # Channel-mixing linear: fold (M, TB) into one wide MXU matmul.
    zr = jnp.dot(yr.reshape(m * tb, c).astype(wlt.dtype), wlt,
                 preferred_element_type=jnp.float32).reshape(m, tb, c)
    zi = jnp.dot(yi.reshape(m * tb, c).astype(wlt.dtype), wlt,
                 preferred_element_type=jnp.float32).reshape(m, tb, c)

    # f32 epilogue: bias (real part only) + GELU, lane-dense stores.
    zr = zr + cb_ref[...][:, None, :]
    or_ref[...] = _gelu_tanh(zr)
    oi_ref[...] = _gelu_tanh(zi)


def spherical_fourier_layer(x, params, modes, *, compute_dtype=jnp.float32,
                            batch_tile=8):
    """x: [B, C, K] float32 -> complex64 [B, C, K]."""
    B, C, K = x.shape
    M = modes

    # Batch tiling: TB == B for small batches (block == full dim), otherwise a
    # multiple of 8 so the second-to-last output block dim satisfies (8, 128).
    TB = B if B <= batch_tile else batch_tile
    B_pad = ((B + TB - 1) // TB) * TB

    xm = jnp.transpose(x[:, :, :M], (0, 2, 1))                        # [B, M, C]
    if B_pad != B:
        xm = jnp.pad(xm, ((0, B_pad - B), (0, 0), (0, 0)))
    xm = xm.astype(compute_dtype)

    wr = jnp.transpose(params["weights_real"], (2, 0, 1)).astype(compute_dtype)
    wi = jnp.transpose(params["weights_imag"], (2, 0, 1)).astype(compute_dtype)
    wlin = params["lin_w"].astype(jnp.float32)                        # [C, C]
    blin = params["lin_b"].astype(jnp.float32)                        # [C]
    bias = params["bias"].astype(jnp.float32)                         # [C, K]
    wlt = wlin.T.astype(compute_dtype)                                # [C, C]

    # Batch-invariant bias path, computed once (hoisted out of the kernel).
    cbias = jnp.dot(wlin, bias) + blin[:, None]                       # [C, K]
    cb_head = cbias[:, :M].T                                          # [M, C]

    out_shape = (jax.ShapeDtypeStruct((M, B_pad, C), jnp.float32),
                 jax.ShapeDtypeStruct((M, B_pad, C), jnp.float32))

    yr, yi = pl.pallas_call(
        _sfno_kernel,
        out_shape=out_shape,
        grid=(B_pad // TB,),
        in_specs=[
            pl.BlockSpec((TB, M, C), lambda g: (g, 0, 0)),
            pl.BlockSpec((M, C, C), lambda g: (0, 0, 0)),
            pl.BlockSpec((M, C, C), lambda g: (0, 0, 0)),
            pl.BlockSpec((C, C), lambda g: (0, 0)),
            pl.BlockSpec((M, C), lambda g: (0, 0)),
        ],
        out_specs=(
            pl.BlockSpec((M, TB, C), lambda g: (0, g, 0)),
            pl.BlockSpec((M, TB, C), lambda g: (0, g, 0)),
        ),
        compiler_params=pltpu.CompilerParams(
            dimension_semantics=("parallel",),
            vmem_limit_bytes=64 * 1024 * 1024),
    )(xm, wr, wi, wlt, cb_head)

    # [M, B, C] -> [B, C, M] (layout plumbing done by XLA, not in the kernel).
    real_head = jnp.transpose(yr[:, :B, :], (1, 2, 0))
    imag_head = jnp.transpose(yi[:, :B, :], (1, 2, 0))

    if K > M:
        # Constant (x-independent) tail: real = gelu(W@bias + b), imag = gelu(0)=0.
        tail_real = _gelu_tanh(cbias[:, M:])                          # [C, K-M]
        real = jnp.concatenate(
            [real_head, jnp.broadcast_to(tail_real[None], (B, C, K - M))], axis=2)
        imag = jnp.concatenate(
            [imag_head, jnp.zeros((B, C, K - M), jnp.float32)], axis=2)
    else:
        real, imag = real_head, imag_head

    return lax.complex(real, imag)


def init_params(key, hidden_dim, lmax, modes):
    num_coeffs = (lmax + 1) ** 2
    k1, k2, k3, k4 = jax.random.split(key, 4)
    # xavier_normal_ on [hidden, hidden, modes]: fan_in = fan_out = hidden*modes
    std = math.sqrt(2.0 / (2.0 * hidden_dim * modes))
    weights_real = std * jax.random.normal(k1, (hidden_dim, hidden_dim, modes), jnp.float32)
    weights_imag = std * jax.random.normal(k2, (hidden_dim, hidden_dim, modes), jnp.float32)
    bias = jnp.zeros((hidden_dim, num_coeffs), jnp.float32)
    bound = 1.0 / math.sqrt(hidden_dim)
    lin_w = jax.random.uniform(k3, (hidden_dim, hidden_dim), jnp.float32, -bound, bound)
    lin_b = jax.random.uniform(k4, (hidden_dim,), jnp.float32, -bound, bound)
    return dict(weights_real=weights_real, weights_imag=weights_imag,
                bias=bias, lin_w=lin_w, lin_b=lin_b)


def reference(x, params, modes):
    """Pure-JAX reference of the same (repaired) semantics."""
    B, C, K = x.shape
    xm = jnp.transpose(x[:, :, :modes], (0, 2, 1))                    # [B, M, C]
    yr = jnp.einsum("bmi,ijm->bjm", xm, params["weights_real"])       # [B, C, M]
    yi = jnp.einsum("bmi,ijm->bjm", xm, params["weights_imag"])
    yr = jnp.pad(yr, ((0, 0), (0, 0), (0, K - modes)))
    yi = jnp.pad(yi, ((0, 0), (0, 0), (0, K - modes)))
    yr = yr + params["bias"][None]
    zr = jnp.einsum("oc,bck->bok", params["lin_w"], yr) + params["lin_b"][None, :, None]
    zi = jnp.einsum("oc,bck->bok", params["lin_w"], yi)
    return lax.complex(_gelu_tanh(zr), _gelu_tanh(zi))


if __name__ == "__main__":
    hidden_dim = 32
    lmax = 3
    modes = lmax + 1
    num_coeffs = (lmax + 1) ** 2
    batch = 4

    key = jax.random.PRNGKey(0)
    kx, kp, kb = jax.random.split(key, 3)
    x = jax.random.normal(kx, (batch, hidden_dim, num_coeffs), jnp.float32)
    params = init_params(kp, hidden_dim, lmax, modes)
    # use a nonzero bias so the hoisted constant-bias path is actually exercised
    params["bias"] = 0.1 * jax.random.normal(kb, (hidden_dim, num_coeffs), jnp.float32)

    y_ref = reference(x, params, modes)

    # f32 path (exact vs reference up to MXU vs XLA reduction ordering)
    y = jax.block_until_ready(spherical_fourier_layer(x, params, modes))
    assert y.shape == (batch, hidden_dim, num_coeffs), y.shape
    assert y.dtype == jnp.complex64, y.dtype
    assert jnp.allclose(y.real, y_ref.real, atol=1e-4, rtol=1e-4)
    assert jnp.allclose(y.imag, y_ref.imag, atol=1e-4, rtol=1e-4)

    # bf16 MXU-input path (f32 accumulation/epilogue) for v6e/v7x throughput
    y_bf16 = jax.block_until_ready(
        spherical_fourier_layer(x, params, modes, compute_dtype=jnp.bfloat16))
    assert jnp.allclose(y_bf16.real, y_ref.real, atol=5e-2, rtol=5e-2)
    assert jnp.allclose(y_bf16.imag, y_ref.imag, atol=5e-2, rtol=5e-2)

    print("KERNEL_OK")
</pallas_src>

<mosaic_0001>
module attributes {stable_mosaic.version = 11 : i64} {
  func.func @_sfno_kernel(%arg0: i32, %arg1: memref<4x4x32xf32, #tpu.memory_space<vmem>>, %arg2: memref<4x32x32xf32, #tpu.memory_space<vmem>>, %arg3: memref<4x32x32xf32, #tpu.memory_space<vmem>>, %arg4: memref<32x32xf32, #tpu.memory_space<vmem>>, %arg5: memref<4x32xf32, #tpu.memory_space<vmem>>, %arg6: memref<4x4x32xf32, #tpu.memory_space<vmem>>, %arg7: memref<4x4x32xf32, #tpu.memory_space<vmem>>) attributes {dimension_semantics = [#tpu.dimension_semantics<parallel>], iteration_bounds = array<i64: 1>, scalar_prefetch = 0 : i64, scratch_operands = 0 : i64, tpu.core_type = #tpu.core_type<tc>, window_params = [{transform_indices = @transform_0, window_bounds = array<i64: 4, 4, 32>}, {pipeline_mode = #tpu.pipeline_mode<synchronous>, transform_indices = @transform_1, window_bounds = array<i64: 4, 32, 32>}, {pipeline_mode = #tpu.pipeline_mode<synchronous>, transform_indices = @transform_2, window_bounds = array<i64: 4, 32, 32>}, {pipeline_mode = #tpu.pipeline_mode<synchronous>, transform_indices = @transform_3, window_bounds = array<i64: 32, 32>}, {pipeline_mode = #tpu.pipeline_mode<synchronous>, transform_indices = @transform_4, window_bounds = array<i64: 4, 32>}, {transform_indices = @transform_5, window_bounds = array<i64: 4, 4, 32>}, {transform_indices = @transform_6, window_bounds = array<i64: 4, 4, 32>}]} {
    %c0 = arith.constant 0 : index
    %c0_0 = arith.constant 0 : index
    %c0_1 = arith.constant 0 : index
    %0 = vector.load %arg1[%c0, %c0_0, %c0_1] : memref<4x4x32xf32, #tpu.memory_space<vmem>>, vector<4x4x32xf32>
    %c0_2 = arith.constant 0 : index
    %c0_3 = arith.constant 0 : index
    %c0_4 = arith.constant 0 : index
    %1 = vector.load %arg2[%c0_2, %c0_3, %c0_4] : memref<4x32x32xf32, #tpu.memory_space<vmem>>, vector<4x32x32xf32>
    %cst = arith.constant dense<0.000000e+00> : vector<4x4x32xf32>
    %2 = tpu.matmul %0, %1, %cst {dimension_numbers = #tpu.dot_dimension_numbers<[2], [1], [0], [2], [0, 1, 0, 0, 1, 2], [1], [0]>} : vector<4x4x32xf32>, vector<4x32x32xf32>, vector<4x4x32xf32> -> vector<4x4x32xf32>
    %c0_5 = arith.constant 0 : index
    %c0_6 = arith.constant 0 : index
    %c0_7 = arith.constant 0 : index
    %3 = vector.load %arg3[%c0_5, %c0_6, %c0_7] : memref<4x32x32xf32, #tpu.memory_space<vmem>>, vector<4x32x32xf32>
    %cst_8 = arith.constant dense<0.000000e+00> : vector<4x4x32xf32>
    %4 = tpu.matmul %0, %3, %cst_8 {dimension_numbers = #tpu.dot_dimension_numbers<[2], [1], [0], [2], [0, 1, 0, 0, 1, 2], [1], [0]>} : vector<4x4x32xf32>, vector<4x32x32xf32>, vector<4x4x32xf32> -> vector<4x4x32xf32>
    %c0_9 = arith.constant 0 : index
    %c0_10 = arith.constant 0 : index
    %5 = vector.load %arg4[%c0_9, %c0_10] : memref<32x32xf32, #tpu.memory_space<vmem>>, vector<32x32xf32>
    %6 = vector.shape_cast %2 : vector<4x4x32xf32> to vector<16x32xf32>
    %cst_11 = arith.constant dense<0.000000e+00> : vector<16x32xf32>
    %7 = tpu.matmul %6, %5, %cst_11 {dimension_numbers = #tpu.dot_dimension_numbers<[1], [0], [0], [1], [0, 0, 1, 1], [], []>} : vector<16x32xf32>, vector<32x32xf32>, vector<16x32xf32> -> vector<16x32xf32>
    %8 = vector.shape_cast %7 : vector<16x32xf32> to vector<4x4x32xf32>
    %9 = vector.shape_cast %4 : vector<4x4x32xf32> to vector<16x32xf32>
    %cst_12 = arith.constant dense<0.000000e+00> : vector<16x32xf32>
    %10 = tpu.matmul %9, %5, %cst_12 {dimension_numbers = #tpu.dot_dimension_numbers<[1], [0], [0], [1], [0, 0, 1, 1], [], []>} : vector<16x32xf32>, vector<32x32xf32>, vector<16x32xf32> -> vector<16x32xf32>
    %11 = vector.shape_cast %10 : vector<16x32xf32> to vector<4x4x32xf32>
    %c0_13 = arith.constant 0 : index
    %c0_14 = arith.constant 0 : index
    %12 = vector.load %arg5[%c0_13, %c0_14] : memref<4x32xf32, #tpu.memory_space<vmem>>, vector<4x32xf32>
    %13 = vector.shape_cast %12 : vector<4x32xf32> to vector<4x1x32xf32>
    %14 = vector.broadcast %13 : vector<4x1x32xf32> to vector<4x4x32xf32>
    %15 = arith.addf %8, %14 : vector<4x4x32xf32>
    %cst_15 = arith.constant 5.000000e-01 : f32
    %16 = vector.broadcast %cst_15 : f32 to vector<4x4x32xf32>
    %17 = arith.mulf %16, %15 : vector<4x4x32xf32>
    %cst_16 = arith.constant 4.471500e-02 : f32
    %18 = vector.broadcast %cst_16 : f32 to vector<4x4x32xf32>
    %19 = arith.mulf %18, %15 : vector<4x4x32xf32>
    %20 = arith.mulf %19, %15 : vector<4x4x32xf32>
    %21 = arith.mulf %20, %15 : vector<4x4x32xf32>
    %22 = arith.addf %15, %21 : vector<4x4x32xf32>
    %cst_17 = arith.constant 0.797884583 : f32
    %23 = vector.broadcast %cst_17 : f32 to vector<4x4x32xf32>
    %24 = arith.mulf %23, %22 : vector<4x4x32xf32>
    %25 = math.tanh %24 : vector<4x4x32xf32>
    %cst_18 = arith.constant 1.000000e+00 : f32
    %26 = vector.broadcast %cst_18 : f32 to vector<4x4x32xf32>
    %27 = arith.addf %26, %25 : vector<4x4x32xf32>
    %28 = arith.mulf %17, %27 : vector<4x4x32xf32>
    %c0_19 = arith.constant 0 : index
    %c0_20 = arith.constant 0 : index
    %c0_21 = arith.constant 0 : index
    %29 = vector.load %arg6[%c0_19, %c0_20, %c0_21] : memref<4x4x32xf32, #tpu.memory_space<vmem>>, vector<4x4x32xf32>
    tpu.vector_store %arg6[%c0_19, %c0_20, %c0_21], %28 {strides = array<i32>} : memref<4x4x32xf32, #tpu.memory_space<vmem>>, vector<4x4x32xf32>,
    %cst_22 = arith.constant 5.000000e-01 : f32
    %30 = vector.broadcast %cst_22 : f32 to vector<4x4x32xf32>
    %31 = arith.mulf %30, %11 : vector<4x4x32xf32>
    %cst_23 = arith.constant 4.471500e-02 : f32
    %32 = vector.broadcast %cst_23 : f32 to vector<4x4x32xf32>
    %33 = arith.mulf %32, %11 : vector<4x4x32xf32>
    %34 = arith.mulf %33, %11 : vector<4x4x32xf32>
    %35 = arith.mulf %34, %11 : vector<4x4x32xf32>
    %36 = arith.addf %11, %35 : vector<4x4x32xf32>
    %cst_24 = arith.constant 0.797884583 : f32
    %37 = vector.broadcast %cst_24 : f32 to vector<4x4x32xf32>
    %38 = arith.mulf %37, %36 : vector<4x4x32xf32>
    %39 = math.tanh %38 : vector<4x4x32xf32>
    %cst_25 = arith.constant 1.000000e+00 : f32
    %40 = vector.broadcast %cst_25 : f32 to vector<4x4x32xf32>
    %41 = arith.addf %40, %39 : vector<4x4x32xf32>
    %42 = arith.mulf %31, %41 : vector<4x4x32xf32>
    %c0_26 = arith.constant 0 : index
    %c0_27 = arith.constant 0 : index
    %c0_28 = arith.constant 0 : index
    %43 = vector.load %arg7[%c0_26, %c0_27, %c0_28] : memref<4x4x32xf32, #tpu.memory_space<vmem>>, vector<4x4x32xf32>
    tpu.vector_store %arg7[%c0_26, %c0_27, %c0_28], %42 {strides = array<i32>} : memref<4x4x32xf32, #tpu.memory_space<vmem>>, vector<4x4x32xf32>,
    return
  }
  func.func @transform_0(%arg0: i32) -> (i32, i32, i32) {
    %c0_i32 = arith.constant 0 : i32
    %c0_i32_0 = arith.constant 0 : i32
    %c0_i32_1 = arith.constant 0 : i32
    return %arg0, %c0_i32, %c0_i32_0 : i32, i32, i32
  }
  func.func @transform_1(%arg0: i32) -> (i32, i32, i32) {
    %c0_i32 = arith.constant 0 : i32
    %c0_i32_0 = arith.constant 0 : i32
    %c0_i32_1 = arith.constant 0 : i32
    %c0_i32_2 = arith.constant 0 : i32
    return %c0_i32, %c0_i32_0, %c0_i32_1 : i32, i32, i32
  }
  func.func @transform_2(%arg0: i32) -> (i32, i32, i32) {
    %c0_i32 = arith.constant 0 : i32
    %c0_i32_0 = arith.constant 0 : i32
    %c0_i32_1 = arith.constant 0 : i32
    %c0_i32_2 = arith.constant 0 : i32
    return %c0_i32, %c0_i32_0, %c0_i32_1 : i32, i32, i32
  }
  func.func @transform_3(%arg0: i32) -> (i32, i32) {
    %c0_i32 = arith.constant 0 : i32
    %c0_i32_0 = arith.constant 0 : i32
    %c0_i32_1 = arith.constant 0 : i32
    return %c0_i32, %c0_i32_0 : i32, i32
  }
  func.func @transform_4(%arg0: i32) -> (i32, i32) {
    %c0_i32 = arith.constant 0 : i32
    %c0_i32_0 = arith.constant 0 : i32
    %c0_i32_1 = arith.constant 0 : i32
    return %c0_i32, %c0_i32_0 : i32, i32
  }
  func.func @transform_5(%arg0: i32) -> (i32, i32, i32) {
    %c0_i32 = arith.constant 0 : i32
    %c0_i32_0 = arith.constant 0 : i32
    %c0_i32_1 = arith.constant 0 : i32
    return %c0_i32, %arg0, %c0_i32_0 : i32, i32, i32
  }
  func.func @transform_6(%arg0: i32) -> (i32, i32, i32) {
    %c0_i32 = arith.constant 0 : i32
    %c0_i32_0 = arith.constant 0 : i32
    %c0_i32_1 = arith.constant 0 : i32
    return %c0_i32, %arg0, %c0_i32_0 : i32, i32, i32
  }
}

</mosaic_0001>

<llo_original>
// kernel: tpu_custom_call.1
$region0: #{tpu_custom_call.1}
  #allocation0 [shape = 'u32[]', space=smem, size = 0x4, offset = 0x4, fixed_abs, tag = 'smem constant byte address 0x4 - core index']
  #allocation1 [shape = 'u32[144,128]{1,0:T(1,128)}', space=vmem, size = 0x12000, scoped, tag = 'internal scratch']
  %s0 = inlined_call_operand.hbm [shape: f32[4,4,32], index: 0, kind: input, shape index: {}]
  %s1 = inlined_call_operand.hbm [shape: f32[4,32,32], index: 1, kind: input, shape index: {}]
  %s2 = inlined_call_operand.hbm [shape: f32[4,32,32], index: 2, kind: input, shape index: {}]
  %s3 = inlined_call_operand.hbm [shape: f32[32,32], index: 3, kind: input, shape index: {}]
  %s4 = inlined_call_operand.vmem [shape: f32[4,32], index: 4, kind: input, shape index: {}]
  %s5 = inlined_call_operand.hbm [shape: f32[4,4,32], index: 5, kind: output, shape index: {0}]
  %s6 = inlined_call_operand.hbm [shape: f32[4,4,32], index: 6, kind: output, shape index: {1}]
  %7 = xla_tuple %s5, %s6
  %s8 = sld [smem:[#allocation0]]
  $region54: #{tpu_custom_call.1} parent=0
    _
  %s10 = ssub.s32 1, %s8
  %s11 = scalar_select 0, %s10, %s8
  $region1: #{tpu_custom_call.1} parent=0
    #allocation2 [shape = 'u8[8192]{0}', space=vmem, size = 0x2000, scoped, tag = 'input window, operand 0, single buffered']
    #allocation3 [shape = 's32[1]{0}', space=sflag, size = 0x4, scoped, tag = 'scoped memory for tpu_custom_call.1']
    #allocation4 [shape = 's32[1]{0}', space=sflag, size = 0x4, scoped, tag = 'scoped memory for tpu_custom_call.1']
    #allocation5 [shape = 'u8[65536]{0}', space=vmem, size = 0x10000, scoped, tag = 'input window, operand 1, single buffered']
    #allocation6 [shape = 's32[1]{0}', space=sflag, size = 0x4, scoped, tag = 'scoped memory for tpu_custom_call.1']
    #allocation7 [shape = 'u8[65536]{0}', space=vmem, size = 0x10000, scoped, tag = 'input window, operand 2, single buffered']
    #allocation8 [shape = 'u8[16384]{0}', space=vmem, size = 0x4000, scoped, tag = 'input window, operand 3, single buffered']
    #allocation9 [shape = 's32[1]{0}', space=sflag, size = 0x4, scoped, tag = 'scoped memory for tpu_custom_call.1']
    #allocation10 [shape = 'u8[8192]{0}', space=vmem, size = 0x2000, scoped, tag = 'output window, operand 0, single buffered']
    #allocation11 [shape = 'u8[8192]{0}', space=vmem, size = 0x2000, scoped, tag = 'output window, operand 1, single buffered']
    #allocation12 [shape = 's32[1]{0}', space=sflag, size = 0x4, scoped, tag = 'scoped memory for tpu_custom_call.1']
    %12 = vsyncpa [#allocation3], 0
    %13 = vsyncpa [#allocation6], 0
    %14 = vsyncpa [#allocation9], 0
    %15 = vsyncpa [#allocation4], 0
    %16 = vsyncpa [#allocation12], 0
    // Predicated region
    $region2: #{tpu_custom_call.1} parent=1 // pred_check
      _
    $region3: #{tpu_custom_call.1} parent=1 // pred_check_branch
      %18 = sbr.rel (0) target = $region5
    $region4: #{tpu_custom_call.1} parent=1 // pred_region
      %s20 = ssub.s32 256, 256
      %21 = vsyncadd [#allocation3], %s20
      %s22 = sshll.u32 [#allocation2], 4
      %s23 = int_to_ptr.vmem [resolvable:$true] %s22
      %28 = dma.hbm_to_vmem [thread:$0]  %s0, 256, %s23, [#allocation3], 64, 64, 4
    $region5: #{tpu_custom_call.1} parent=1 // pred_fallthru
      _
    // Predicated region
    $region6: #{tpu_custom_call.1} parent=1 // pred_check
      _
    $region7: #{tpu_custom_call.1} parent=1 // pred_check_branch
      %30 = sbr.rel (0) target = $region9
    $region8: #{tpu_custom_call.1} parent=1 // pred_region
      %s32 = ssub.s32 2048, 2048
      %33 = vsyncadd [#allocation6], %s32
      %s34 = sshll.u32 [#allocation5], 4
      %s35 = int_to_ptr.vmem [resolvable:$true] %s34
      %40 = dma.hbm_to_vmem [thread:$0]  %s1, 2048, %s35, [#allocation6], 128, 128, 8
    $region9: #{tpu_custom_call.1} parent=1 // pred_fallthru
      _
    // Predicated region
    $region10: #{tpu_custom_call.1} parent=1 // pred_check
      _
    $region11: #{tpu_custom_call.1} parent=1 // pred_check_branch
      %42 = sbr.rel (0) target = $region13
    $region12: #{tpu_custom_call.1} parent=1 // pred_region
      %s44 = ssub.s32 2048, 2048
      %45 = vsyncadd [#allocation6], %s44
      %s46 = sshll.u32 [#allocation7], 4
      %s47 = int_to_ptr.vmem [resolvable:$true] %s46
      %52 = dma.hbm_to_vmem [thread:$0]  %s2, 2048, %s47, [#allocation6], 128, 128, 8
    $region13: #{tpu_custom_call.1} parent=1 // pred_fallthru
      _
    // Predicated region
    $region14: #{tpu_custom_call.1} parent=1 // pred_check
      _
    $region15: #{tpu_custom_call.1} parent=1 // pred_check_branch
      %54 = sbr.rel (0) target = $region17
    $region16: #{tpu_custom_call.1} parent=1 // pred_region
      %s56 = ssub.s32 512, 512
      %57 = vsyncadd [#allocation9], %s56
      %s58 = sshll.u32 [#allocation8], 4
      %s59 = int_to_ptr.vmem [resolvable:$true] %s58
      %64 = dma.hbm_to_vmem [thread:$0]  %s3, 512, %s59, [#allocation9], 128, 128, 8
    $region17: #{tpu_custom_call.1} parent=1 // pred_fallthru
      _
    // Predicated region
    $region18: #{tpu_custom_call.1} parent=1 // pred_check
      _
    $region19: #{tpu_custom_call.1} parent=1 // pred_check_branch
      %66 = sbr.rel (0) target = $region21
    $region20: #{tpu_custom_call.1} parent=1 // pred_region
      _
    $region21: #{tpu_custom_call.1} parent=1 // pred_fallthru
      _
    // Predicated region
    $region22: #{tpu_custom_call.1} parent=1 // pred_check
      _
    $region23: #{tpu_custom_call.1} parent=1 // pred_check_branch
      %68 = sbr.rel (0) target = $region25
    $region24: #{tpu_custom_call.1} parent=1 // pred_region
      %69 = dma.done [#allocation3], 256
    $region25: #{tpu_custom_call.1} parent=1 // pred_fallthru
      _
    // Predicated region
    $region26: #{tpu_custom_call.1} parent=1 // pred_check
      _
    $region27: #{tpu_custom_call.1} parent=1 // pred_check_branch
      %71 = sbr.rel (0) target = $region29
    $region28: #{tpu_custom_call.1} parent=1 // pred_region
      %72 = dma.done [#allocation6], 2048
    $region29: #{tpu_custom_call.1} parent=1 // pred_fallthru
      _
    // Predicated region
    $region30: #{tpu_custom_call.1} parent=1 // pred_check
      _
    $region31: #{tpu_custom_call.1} parent=1 // pred_check_branch
      %74 = sbr.rel (0) target = $region33
    $region32: #{tpu_custom_call.1} parent=1 // pred_region
      %75 = dma.done [#allocation6], 2048
    $region33: #{tpu_custom_call.1} parent=1 // pred_fallthru
      _
    // Predicated region
    $region34: #{tpu_custom_call.1} parent=1 // pred_check
      _
    $region35: #{tpu_custom_call.1} parent=1 // pred_check_branch
      %77 = sbr.rel (0) target = $region37
    $region36: #{tpu_custom_call.1} parent=1 // pred_region
      %78 = dma.done [#allocation9], 512
    $region37: #{tpu_custom_call.1} parent=1 // pred_fallthru
      _
    %v79 = vld [vmem:[#allocation2] sm:$0xf]
    %v80 = vld [vmem:[#allocation2 + $0x4] sm:$0xf]
    %v81 = vld [vmem:[#allocation2 + $0x8] sm:$0xf]
    %v82 = vld [vmem:[#allocation2 + $0xc] sm:$0xf]
    %v83 = vld [vmem:[#allocation5] sm:$0xff]
    %v84 = vld [vmem:[#allocation5 + $0x8] sm:$0xff]
    %v85 = vld [vmem:[#allocation5 + $0x10] sm:$0xff]
    %v86 = vld [vmem:[#allocation5 + $0x18] sm:$0xff]
    %v87 = vld [vmem:[#allocation5 + $0x20] sm:$0xff]
    %v88 = vld [vmem:[#allocation5 + $0x28] sm:$0xff]
    %v89 = vld [vmem:[#allocation5 + $0x30] sm:$0xff]
    %v90 = vld [vmem:[#allocation5 + $0x38] sm:$0xff]
    %v91 = vld [vmem:[#allocation5 + $0x40] sm:$0xff]
    %v92 = vld [vmem:[#allocation5 + $0x48] sm:$0xff]
    %v93 = vld [vmem:[#allocation5 + $0x50] sm:$0xff]
    %v94 = vld [vmem:[#allocation5 + $0x58] sm:$0xff]
    %v95 = vld [vmem:[#allocation5 + $0x60] sm:$0xff]
    %v96 = vld [vmem:[#allocation5 + $0x68] sm:$0xff]
    %v97 = vld [vmem:[#allocation5 + $0x70] sm:$0xff]
    %v98 = vld [vmem:[#allocation5 + $0x78] sm:$0xff]
    %v99 = vcombine.low %v79, %v81
    %v101 = vunpack.c.l.s4 1983009808
    %v102 = vunpack.c.0.s8 %v101
    %v103 = vlaneseq
    %v104 = vshrl.u32 %v103, 7
    %v105 = vsub.s32 %v102, %v104
    %v106 = vrot.slane %v99, %v105
    %v107 = vcombine.low %v80, %v82
    %v109 = vunpack.c.l.s4 1983009808
    %v110 = vunpack.c.0.s8 %v109
    %v111 = vlaneseq
    %v112 = vshrl.u32 %v111, 7
    %v113 = vsub.s32 %v110, %v112
    %v114 = vrot.slane %v107, %v113
    %v115 = vcombine.low %v106, %v114
    %v116 = vcombine.high %v106, %v114
    %v118 = vunpack.c.l.s4 1934713408
    %v119 = vunpack.c.0.s8 %v118
    %v120 = vlaneseq
    %v121 = vshrl.u32 %v120, 7
    %v122 = vsub.s32 %v119, %v121
    %v123 = vrot.slane %v115, %v122
    %v125 = vunpack.c.l.s4 1934713408
    %v126 = vunpack.c.0.s8 %v125
    %v127 = vlaneseq
    %v128 = vshrl.u32 %v127, 7
    %v129 = vsub.s32 %v126, %v128
    %v130 = vrot.slane %v116, %v129
    %v131 = vcombine.high %v123, 0.0
    %v132 = vcombine.high %v130, 0.0
    %vm133 = vcmask 261120
    %v135 = vsel %vm133, %v123, 0
    %137 = vmatprep.subr.mxu0 0.0
    %138 = vmatpush1.msra.mxu0 0.0
    %139 = vmatprep.subr.mxu0 0.0
    %140 = vmatpush1.msra.mxu0 0.0
    %141 = vmatprep.subr.mxu0 0.0
    %142 = vmatpush1.msra.mxu0 0.0
    %143 = vmatprep.subr.mxu0 0.0
    %144 = vmatpush1.msra.mxu0 0.0
    %145 = vmatprep.subr.mxu0 0.0
    %146 = vmatpush1.msra.mxu0 0.0
    %147 = vmatprep.subr.mxu0 0.0
    %148 = vmatpush1.msra.mxu0 0.0
    %149 = vmatprep.subr.mxu0 0.0
    %150 = vmatpush1.msra.mxu0 0.0
    %151 = vmatprep.subr.mxu0 0.0
    %152 = vmatpush1.msra.mxu0 0.0
    %153 = vmatprep.subr.mxu0 0.0
    %154 = vmatpush1.msra.mxu0 0.0
    %155 = vmatprep.subr.mxu0 0.0
    %156 = vmatpush1.msra.mxu0 0.0
    %157 = vmatprep.subr.mxu0 0.0
    %158 = vmatpush1.msra.mxu0 0.0
    %159 = vmatprep.subr.mxu0 0.0
    %160 = vmatpush1.msra.mxu0 0.0
    %161 = vmatprep.subr.mxu0 0.0
    %162 = vmatpush1.msra.mxu0 %v86
    %163 = vmatprep.subr.mxu0 0.0
    %164 = vmatpush1.msra.mxu0 %v85
    %165 = vmatprep.subr.mxu0 0.0
    %166 = vmatpush1.msra.mxu0 %v84
    %167 = vmatprep.subr.mxu0 0.0
    %168 = vmatpush1.msra.mxu0 %v83
    %169 = vmatprep.subr.mxu0 0.0
    %170 = vmatpush2.msra.mxu0 0.0
    %171 = vmatprep.subr.mxu0 0.0
    %172 = vmatpush2.msra.mxu0 0.0
    %173 = vmatprep.subr.mxu0 0.0
    %174 = vmatpush2.msra.mxu0 0.0
    %175 = vmatprep.subr.mxu0 0.0
    %176 = vmatpush2.msra.mxu0 0.0
    %177 = vmatprep.subr.mxu0 0.0
    %178 = vmatpush2.msra.mxu0 0.0
    %179 = vmatprep.subr.mxu0 0.0
    %180 = vmatpush2.msra.mxu0 0.0
    %181 = vmatprep.subr.mxu0 0.0
    %182 = vmatpush2.msra.mxu0 0.0
    %183 = vmatprep.subr.mxu0 0.0
    %184 = vmatpush2.msra.mxu0 0.0
    %185 = vmatprep.subr.mxu0 0.0
    %186 = vmatpush2.msra.mxu0 0.0
    %187 = vmatprep.subr.mxu0 0.0
    %188 = vmatpush2.msra.mxu0 0.0
    %189 = vmatprep.subr.mxu0 0.0
    %190 = vmatpush2.msra.mxu0 0.0
    %191 = vmatprep.subr.mxu0 0.0
    %192 = vmatpush2.msra.mxu0 0.0
    %193 = vmatprep.subr.mxu0 0.0
    %194 = vmatpush2.msra.mxu0 0.0
    %195 = vmatprep.subr.mxu0 0.0
    %196 = vmatpush2.msra.mxu0 0.0
    %197 = vmatprep.subr.mxu0 0.0
    %198 = vmatpush2.msra.mxu0 0.0
    %199 = vmatprep.subr.mxu0 0.0
    %200 = vmatpush2.msra.mxu0 0.0
    %201 = vmatprep.mubr.f32.mxu0 0.0
    %202 = vmatmul.mubr.f32.gmra.mxu0 %v135
    %v203 = vpop.f32.mrf.mxu0
    %v204 = vadd.f32 0.0, %v203
    %v205 = vpop.f32.mrf.mxu0
    %206 = vdwg.mxu0
    %v208 = vsel %vm133, %v131, 0
    %210 = vmatprep.subr.mxu0 0.0
    %211 = vmatpush1.msra.mxu0 0.0
    %212 = vmatprep.subr.mxu0 0.0
    %213 = vmatpush1.msra.mxu0 0.0
    %214 = vmatprep.subr.mxu0 0.0
    %215 = vmatpush1.msra.mxu0 0.0
    %216 = vmatprep.subr.mxu0 0.0
    %217 = vmatpush1.msra.mxu0 0.0
    %218 = vmatprep.subr.mxu0 0.0
    %219 = vmatpush1.msra.mxu0 0.0
    %220 = vmatprep.subr.mxu0 0.0
    %221 = vmatpush1.msra.mxu0 0.0
    %222 = vmatprep.subr.mxu0 0.0
    %223 = vmatpush1.msra.mxu0 0.0
    %224 = vmatprep.subr.mxu0 0.0
    %225 = vmatpush1.msra.mxu0 0.0
    %226 = vmatprep.subr.mxu0 0.0
    %227 = vmatpush1.msra.mxu0 0.0
    %228 = vmatprep.subr.mxu0 0.0
    %229 = vmatpush1.msra.mxu0 0.0
    %230 = vmatprep.subr.mxu0 0.0
    %231 = vmatpush1.msra.mxu0 0.0
    %232 = vmatprep.subr.mxu0 0.0
    %233 = vmatpush1.msra.mxu0 0.0
    %234 = vmatprep.subr.mxu0 0.0
    %235 = vmatpush1.msra.mxu0 %v90
    %236 = vmatprep.subr.mxu0 0.0
    %237 = vmatpush1.msra.mxu0 %v89
    %238 = vmatprep.subr.mxu0 0.0
    %239 = vmatpush1.msra.mxu0 %v88
    %240 = vmatprep.subr.mxu0 0.0
    %241 = vmatpush1.msra.mxu0 %v87
    %242 = vmatprep.subr.mxu0 0.0
    %243 = vmatpush2.msra.mxu0 0.0
    %244 = vmatprep.subr.mxu0 0.0
    %245 = vmatpush2.msra.mxu0 0.0
    %246 = vmatprep.subr.mxu0 0.0
    %247 = vmatpush2.msra.mxu0 0.0
    %248 = vmatprep.subr.mxu0 0.0
    %249 = vmatpush2.msra.mxu0 0.0
    %250 = vmatprep.subr.mxu0 0.0
    %251 = vmatpush2.msra.mxu0 0.0
    %252 = vmatprep.subr.mxu0 0.0
    %253 = vmatpush2.msra.mxu0 0.0
    %254 = vmatprep.subr.mxu0 0.0
    %255 = vmatpush2.msra.mxu0 0.0
    %256 = vmatprep.subr.mxu0 0.0
    %257 = vmatpush2.msra.mxu0 0.0
    %258 = vmatprep.subr.mxu0 0.0
    %259 = vmatpush2.msra.mxu0 0.0
    %260 = vmatprep.subr.mxu0 0.0
    %261 = vmatpush2.msra.mxu0 0.0
    %262 = vmatprep.subr.mxu0 0.0
    %263 = vmatpush2.msra.mxu0 0.0
    %264 = vmatprep.subr.mxu0 0.0
    %265 = vmatpush2.msra.mxu0 0.0
    %266 = vmatprep.subr.mxu0 0.0
    %267 = vmatpush2.msra.mxu0 0.0
    %268 = vmatprep.subr.mxu0 0.0
    %269 = vmatpush2.msra.mxu0 0.0
    %270 = vmatprep.subr.mxu0 0.0
    %271 = vmatpush2.msra.mxu0 0.0
    %272 = vmatprep.subr.mxu0 0.0
    %273 = vmatpush2.msra.mxu0 0.0
    %274 = vmatprep.mubr.f32.mxu0 0.0
    %275 = vmatmul.mubr.f32.gmra.mxu0 %v208
    %v276 = vpop.f32.mrf.mxu0
    %v277 = vadd.f32 0.0, %v276
    %v278 = vpop.f32.mrf.mxu0
    %279 = vdwg.mxu0
    %v281 = vsel %vm133, %v130, 0
    %283 = vmatprep.subr.mxu0 0.0
    %284 = vmatpush1.msra.mxu0 0.0
    %285 = vmatprep.subr.mxu0 0.0
    %286 = vmatpush1.msra.mxu0 0.0
    %287 = vmatprep.subr.mxu0 0.0
    %288 = vmatpush1.msra.mxu0 0.0
    %289 = vmatprep.subr.mxu0 0.0
    %290 = vmatpush1.msra.mxu0 0.0
    %291 = vmatprep.subr.mxu0 0.0
    %292 = vmatpush1.msra.mxu0 0.0
    %293 = vmatprep.subr.mxu0 0.0
    %294 = vmatpush1.msra.mxu0 0.0
    %295 = vmatprep.subr.mxu0 0.0
    %296 = vmatpush1.msra.mxu0 0.0
    %297 = vmatprep.subr.mxu0 0.0
    %298 = vmatpush1.msra.mxu0 0.0
    %299 = vmatprep.subr.mxu0 0.0
    %300 = vmatpush1.msra.mxu0 0.0
    %301 = vmatprep.subr.mxu0 0.0
    %302 = vmatpush1.msra.mxu0 0.0
    %303 = vmatprep.subr.mxu0 0.0
    %304 = vmatpush1.msra.mxu0 0.0
    %305 = vmatprep.subr.mxu0 0.0
    %306 = vmatpush1.msra.mxu0 0.0
    %307 = vmatprep.subr.mxu0 0.0
    %308 = vmatpush1.msra.mxu0 %v94
    %309 = vmatprep.subr.mxu0 0.0
    %310 = vmatpush1.msra.mxu0 %v93
    %311 = vmatprep.subr.mxu0 0.0
    %312 = vmatpush1.msra.mxu0 %v92
    %313 = vmatprep.subr.mxu0 0.0
    %314 = vmatpush1.msra.mxu0 %v91
    %315 = vmatprep.subr.mxu0 0.0
    %316 = vmatpush2.msra.mxu0 0.0
    %317 = vmatprep.subr.mxu0 0.0
    %318 = vmatpush2.msra.mxu0 0.0
    %319 = vmatprep.subr.mxu0 0.0
    %320 = vmatpush2.msra.mxu0 0.0
    %321 = vmatprep.subr.mxu0 0.0
    %322 = vmatpush2.msra.mxu0 0.0
    %323 = vmatprep.subr.mxu0 0.0
    %324 = vmatpush2.msra.mxu0 0.0
    %325 = vmatprep.subr.mxu0 0.0
    %326 = vmatpush2.msra.mxu0 0.0
    %327 = vmatprep.subr.mxu0 0.0
    %328 = vmatpush2.msra.mxu0 0.0
    %329 = vmatprep.subr.mxu0 0.0
    %330 = vmatpush2.msra.mxu0 0.0
    %331 = vmatprep.subr.mxu0 0.0
    %332 = vmatpush2.msra.mxu0 0.0
    %333 = vmatprep.subr.mxu0 0.0
    %334 = vmatpush2.msra.mxu0 0.0
    %335 = vmatprep.subr.mxu0 0.0
    %336 = vmatpush2.msra.mxu0 0.0
    %337 = vmatprep.subr.mxu0 0.0
    %338 = vmatpush2.msra.mxu0 0.0
    %339 = vmatprep.subr.mxu0 0.0
    %340 = vmatpush2.msra.mxu0 0.0
    %341 = vmatprep.subr.mxu0 0.0
    %342 = vmatpush2.msra.mxu0 0.0
    %343 = vmatprep.subr.mxu0 0.0
    %344 = vmatpush2.msra.mxu0 0.0
    %345 = vmatprep.subr.mxu0 0.0
    %346 = vmatpush2.msra.mxu0 0.0
    %347 = vmatprep.mubr.f32.mxu0 0.0
    %348 = vmatmul.mubr.f32.gmra.mxu0 %v281
    %v349 = vpop.f32.mrf.mxu0
    %v350 = vadd.f32 0.0, %v349
    %v351 = vpop.f32.mrf.mxu0
    %352 = vdwg.mxu0
    %v354 = vsel %vm133, %v132, 0
    %356 = vmatprep.subr.mxu0 0.0
    %357 = vmatpush1.msra.mxu0 0.0
    %358 = vmatprep.subr.mxu0 0.0
    %359 = vmatpush1.msra.mxu0 0.0
    %360 = vmatprep.subr.mxu0 0.0
    %361 = vmatpush1.msra.mxu0 0.0
    %362 = vmatprep.subr.mxu0 0.0
    %363 = vmatpush1.msra.mxu0 0.0
    %364 = vmatprep.subr.mxu0 0.0
    %365 = vmatpush1.msra.mxu0 0.0
    %366 = vmatprep.subr.mxu0 0.0
    %367 = vmatpush1.msra.mxu0 0.0
    %368 = vmatprep.subr.mxu0 0.0
    %369 = vmatpush1.msra.mxu0 0.0
    %370 = vmatprep.subr.mxu0 0.0
    %371 = vmatpush1.msra.mxu0 0.0
    %372 = vmatprep.subr.mxu0 0.0
    %373 = vmatpush1.msra.mxu0 0.0
    %374 = vmatprep.subr.mxu0 0.0
    %375 = vmatpush1.msra.mxu0 0.0
    %376 = vmatprep.subr.mxu0 0.0
    %377 = vmatpush1.msra.mxu0 0.0
    %378 = vmatprep.subr.mxu0 0.0
    %379 = vmatpush1.msra.mxu0 0.0
    %380 = vmatprep.subr.mxu0 0.0
    %381 = vmatpush1.msra.mxu0 %v98
    %382 = vmatprep.subr.mxu0 0.0
    %383 = vmatpush1.msra.mxu0 %v97
    %384 = vmatprep.subr.mxu0 0.0
    %385 = vmatpush1.msra.mxu0 %v96
    %386 = vmatprep.subr.mxu0 0.0
    %387 = vmatpush1.msra.mxu0 %v95
    %388 = vmatprep.subr.mxu0 0.0
    %389 = vmatpush2.msra.mxu0 0.0
    %390 = vmatprep.subr.mxu0 0.0
    %391 = vmatpush2.msra.mxu0 0.0
    %392 = vmatprep.subr.mxu0 0.0
    %393 = vmatpush2.msra.mxu0 0.0
    %394 = vmatprep.subr.mxu0 0.0
    %395 = vmatpush2.msra.mxu0 0.0
    %396 = vmatprep.subr.mxu0 0.0
    %397 = vmatpush2.msra.mxu0 0.0
    %398 = vmatprep.subr.mxu0 0.0
    %399 = vmatpush2.msra.mxu0 0.0
    %400 = vmatprep.subr.mxu0 0.0
    %401 = vmatpush2.msra.mxu0 0.0
    %402 = vmatprep.subr.mxu0 0.0
    %403 = vmatpush2.msra.mxu0 0.0
    %404 = vmatprep.subr.mxu0 0.0
    %405 = vmatpush2.msra.mxu0 0.0
    %406 = vmatprep.subr.mxu0 0.0
    %407 = vmatpush2.msra.mxu0 0.0
    %408 = vmatprep.subr.mxu0 0.0
    %409 = vmatpush2.msra.mxu0 0.0
    %410 = vmatprep.subr.mxu0 0.0
    %411 = vmatpush2.msra.mxu0 0.0
    %412 = vmatprep.subr.mxu0 0.0
    %413 = vmatpush2.msra.mxu0 0.0
    %414 = vmatprep.subr.mxu0 0.0
    %415 = vmatpush2.msra.mxu0 0.0
    %416 = vmatprep.subr.mxu0 0.0
    %417 = vmatpush2.msra.mxu0 0.0
    %418 = vmatprep.subr.mxu0 0.0
    %419 = vmatpush2.msra.mxu0 0.0
    %420 = vmatprep.mubr.f32.mxu0 0.0
    %421 = vmatmul.mubr.f32.gmra.mxu0 %v354
    %v422 = vpop.f32.mrf.mxu0
    %v423 = vadd.f32 0.0, %v422
    %v424 = vpop.f32.mrf.mxu0
    %425 = vdwg.mxu0
    %v426 = vld [vmem:[#allocation7] sm:$0xff]
    %v427 = vld [vmem:[#allocation7 + $0x8] sm:$0xff]
    %v428 = vld [vmem:[#allocation7 + $0x10] sm:$0xff]
    %v429 = vld [vmem:[#allocation7 + $0x18] sm:$0xff]
    %v430 = vld [vmem:[#allocation7 + $0x20] sm:$0xff]
    %v431 = vld [vmem:[#allocation7 + $0x28] sm:$0xff]
    %v432 = vld [vmem:[#allocation7 + $0x30] sm:$0xff]
    %v433 = vld [vmem:[#allocation7 + $0x38] sm:$0xff]
    %v434 = vld [vmem:[#allocation7 + $0x40] sm:$0xff]
    %v435 = vld [vmem:[#allocation7 + $0x48] sm:$0xff]
    %v436 = vld [vmem:[#allocation7 + $0x50] sm:$0xff]
    %v437 = vld [vmem:[#allocation7 + $0x58] sm:$0xff]
    %v438 = vld [vmem:[#allocation7 + $0x60] sm:$0xff]
    %v439 = vld [vmem:[#allocation7 + $0x68] sm:$0xff]
    %v440 = vld [vmem:[#allocation7 + $0x70] sm:$0xff]
    %v441 = vld [vmem:[#allocation7 + $0x78] sm:$0xff]
    %442 = vmatprep.subr.mxu0 0.0
    %443 = vmatpush1.msra.mxu0 0.0
    %444 = vmatprep.subr.mxu0 0.0
    %445 = vmatpush1.msra.mxu0 0.0
    %446 = vmatprep.subr.mxu0 0.0
    %447 = vmatpush1.msra.mxu0 0.0
    %448 = vmatprep.subr.mxu0 0.0
    %449 = vmatpush1.msra.mxu0 0.0
    %450 = vmatprep.subr.mxu0 0.0
    %451 = vmatpush1.msra.mxu0 0.0
    %452 = vmatprep.subr.mxu0 0.0
    %453 = vmatpush1.msra.mxu0 0.0
    %454 = vmatprep.subr.mxu0 0.0
    %455 = vmatpush1.msra.mxu0 0.0
    %456 = vmatprep.subr.mxu0 0.0
    %457 = vmatpush1.msra.mxu0 0.0
    %458 = vmatprep.subr.mxu0 0.0
    %459 = vmatpush1.msra.mxu0 0.0
    %460 = vmatprep.subr.mxu0 0.0
    %461 = vmatpush1.msra.mxu0 0.0
    %462 = vmatprep.subr.mxu0 0.0
    %463 = vmatpush1.msra.mxu0 0.0
    %464 = vmatprep.subr.mxu0 0.0
    %465 = vmatpush1.msra.mxu0 0.0
    %466 = vmatprep.subr.mxu0 0.0
    %467 = vmatpush1.msra.mxu0 %v429
    %468 = vmatprep.subr.mxu0 0.0
    %469 = vmatpush1.msra.mxu0 %v428
    %470 = vmatprep.subr.mxu0 0.0
    %471 = vmatpush1.msra.mxu0 %v427
    %472 = vmatprep.subr.mxu0 0.0
    %473 = vmatpush1.msra.mxu0 %v426
    %474 = vmatprep.subr.mxu0 0.0
    %475 = vmatpush2.msra.mxu0 0.0
    %476 = vmatprep.subr.mxu0 0.0
    %477 = vmatpush2.msra.mxu0 0.0
    %478 = vmatprep.subr.mxu0 0.0
    %479 = vmatpush2.msra.mxu0 0.0
    %480 = vmatprep.subr.mxu0 0.0
    %481 = vmatpush2.msra.mxu0 0.0
    %482 = vmatprep.subr.mxu0 0.0
    %483 = vmatpush2.msra.mxu0 0.0
    %484 = vmatprep.subr.mxu0 0.0
    %485 = vmatpush2.msra.mxu0 0.0
    %486 = vmatprep.subr.mxu0 0.0
    %487 = vmatpush2.msra.mxu0 0.0
    %488 = vmatprep.subr.mxu0 0.0
    %489 = vmatpush2.msra.mxu0 0.0
    %490 = vmatprep.subr.mxu0 0.0
    %491 = vmatpush2.msra.mxu0 0.0
    %492 = vmatprep.subr.mxu0 0.0
    %493 = vmatpush2.msra.mxu0 0.0
    %494 = vmatprep.subr.mxu0 0.0
    %495 = vmatpush2.msra.mxu0 0.0
    %496 = vmatprep.subr.mxu0 0.0
    %497 = vmatpush2.msra.mxu0 0.0
    %498 = vmatprep.subr.mxu0 0.0
    %499 = vmatpush2.msra.mxu0 0.0
    %500 = vmatprep.subr.mxu0 0.0
    %501 = vmatpush2.msra.mxu0 0.0
    %502 = vmatprep.subr.mxu0 0.0
    %503 = vmatpush2.msra.mxu0 0.0
    %504 = vmatprep.subr.mxu0 0.0
    %505 = vmatpush2.msra.mxu0 0.0
    %506 = vmatprep.mubr.f32.mxu0 0.0
    %507 = vmatmul.mubr.f32.gmra.mxu0 %v135
    %v508 = vpop.f32.mrf.mxu0
    %v509 = vadd.f32 0.0, %v508
    %v510 = vpop.f32.mrf.mxu0
    %511 = vdwg.mxu0
    %512 = vmatprep.subr.mxu0 0.0
    %513 = vmatpush1.msra.mxu0 0.0
    %514 = vmatprep.subr.mxu0 0.0
    %515 = vmatpush1.msra.mxu0 0.0
    %516 = vmatprep.subr.mxu0 0.0
    %517 = vmatpush1.msra.mxu0 0.0
    %518 = vmatprep.subr.mxu0 0.0
    %519 = vmatpush1.msra.mxu0 0.0
    %520 = vmatprep.subr.mxu0 0.0
    %521 = vmatpush1.msra.mxu0 0.0
    %522 = vmatprep.subr.mxu0 0.0
    %523 = vmatpush1.msra.mxu0 0.0
    %524 = vmatprep.subr.mxu0 0.0
    %525 = vmatpush1.msra.mxu0 0.0
    %526 = vmatprep.subr.mxu0 0.0
    %527 = vmatpush1.msra.mxu0 0.0
    %528 = vmatprep.subr.mxu0 0.0
    %529 = vmatpush1.msra.mxu0 0.0
    %530 = vmatprep.subr.mxu0 0.0
    %531 = vmatpush1.msra.mxu0 0.0
    %532 = vmatprep.subr.mxu0 0.0
    %533 = vmatpush1.msra.mxu0 0.0
    %534 = vmatprep.subr.mxu0 0.0
    %535 = vmatpush1.msra.mxu0 0.0
    %536 = vmatprep.subr.mxu0 0.0
    %537 = vmatpush1.msra.mxu0 %v433
    %538 = vmatprep.subr.mxu0 0.0
    %539 = vmatpush1.msra.mxu0 %v432
    %540 = vmatprep.subr.mxu0 0.0
    %541 = vmatpush1.msra.mxu0 %v431
    %542 = vmatprep.subr.mxu0 0.0
    %543 = vmatpush1.msra.mxu0 %v430
    %544 = vmatprep.subr.mxu0 0.0
    %545 = vmatpush2.msra.mxu0 0.0
    %546 = vmatprep.subr.mxu0 0.0
    %547 = vmatpush2.msra.mxu0 0.0
    %548 = vmatprep.subr.mxu0 0.0
    %549 = vmatpush2.msra.mxu0 0.0
    %550 = vmatprep.subr.mxu0 0.0
    %551 = vmatpush2.msra.mxu0 0.0
    %552 = vmatprep.subr.mxu0 0.0
    %553 = vmatpush2.msra.mxu0 0.0
    %554 = vmatprep.subr.mxu0 0.0
    %555 = vmatpush2.msra.mxu0 0.0
    %556 = vmatprep.subr.mxu0 0.0
    %557 = vmatpush2.msra.mxu0 0.0
    %558 = vmatprep.subr.mxu0 0.0
    %559 = vmatpush2.msra.mxu0 0.0
    %560 = vmatprep.subr.mxu0 0.0
    %561 = vmatpush2.msra.mxu0 0.0
    %562 = vmatprep.subr.mxu0 0.0
    %563 = vmatpush2.msra.mxu0 0.0
    %564 = vmatprep.subr.mxu0 0.0
    %565 = vmatpush2.msra.mxu0 0.0
    %566 = vmatprep.subr.mxu0 0.0
    %567 = vmatpush2.msra.mxu0 0.0
    %568 = vmatprep.subr.mxu0 0.0
    %569 = vmatpush2.msra.mxu0 0.0
    %570 = vmatprep.subr.mxu0 0.0
    %571 = vmatpush2.msra.mxu0 0.0
    %572 = vmatprep.subr.mxu0 0.0
    %573 = vmatpush2.msra.mxu0 0.0
    %574 = vmatprep.subr.mxu0 0.0
    %575 = vmatpush2.msra.mxu0 0.0
    %576 = vmatprep.mubr.f32.mxu0 0.0
    %577 = vmatmul.mubr.f32.gmra.mxu0 %v208
    %v578 = vpop.f32.mrf.mxu0
    %v579 = vadd.f32 0.0, %v578
    %v580 = vpop.f32.mrf.mxu0
    %581 = vdwg.mxu0
    %582 = vmatprep.subr.mxu0 0.0
    %583 = vmatpush1.msra.mxu0 0.0
    %584 = vmatprep.subr.mxu0 0.0
    %585 = vmatpush1.msra.mxu0 0.0
    %586 = vmatprep.subr.mxu0 0.0
    %587 = vmatpush1.msra.mxu0 0.0
    %588 = vmatprep.subr.mxu0 0.0
    %589 = vmatpush1.msra.mxu0 0.0
    %590 = vmatprep.subr.mxu0 0.0
    %591 = vmatpush1.msra.mxu0 0.0
    %592 = vmatprep.subr.mxu0 0.0
    %593 = vmatpush1.msra.mxu0 0.0
    %594 = vmatprep.subr.mxu0 0.0
    %595 = vmatpush1.msra.mxu0 0.0
    %596 = vmatprep.subr.mxu0 0.0
    %597 = vmatpush1.msra.mxu0 0.0
    %598 = vmatprep.subr.mxu0 0.0
    %599 = vmatpush1.msra.mxu0 0.0
    %600 = vmatprep.subr.mxu0 0.0
    %601 = vmatpush1.msra.mxu0 0.0
    %602 = vmatprep.subr.mxu0 0.0
    %603 = vmatpush1.msra.mxu0 0.0
    %604 = vmatprep.subr.mxu0 0.0
    %605 = vmatpush1.msra.mxu0 0.0
    %606 = vmatprep.subr.mxu0 0.0
    %607 = vmatpush1.msra.mxu0 %v437
    %608 = vmatprep.subr.mxu0 0.0
    %609 = vmatpush1.msra.mxu0 %v436
    %610 = vmatprep.subr.mxu0 0.0
    %611 = vmatpush1.msra.mxu0 %v435
    %612 = vmatprep.subr.mxu0 0.0
    %613 = vmatpush1.msra.mxu0 %v434
    %614 = vmatprep.subr.mxu0 0.0
    %615 = vmatpush2.msra.mxu0 0.0
    %616 = vmatprep.subr.mxu0 0.0
    %617 = vmatpush2.msra.mxu0 0.0
    %618 = vmatprep.subr.mxu0 0.0
    %619 = vmatpush2.msra.mxu0 0.0
    %620 = vmatprep.subr.mxu0 0.0
    %621 = vmatpush2.msra.mxu0 0.0
    %622 = vmatprep.subr.mxu0 0.0
    %623 = vmatpush2.msra.mxu0 0.0
    %624 = vmatprep.subr.mxu0 0.0
    %625 = vmatpush2.msra.mxu0 0.0
    %626 = vmatprep.subr.mxu0 0.0
    %627 = vmatpush2.msra.mxu0 0.0
    %628 = vmatprep.subr.mxu0 0.0
    %629 = vmatpush2.msra.mxu0 0.0
    %630 = vmatprep.subr.mxu0 0.0
    %631 = vmatpush2.msra.mxu0 0.0
    %632 = vmatprep.subr.mxu0 0.0
    %633 = vmatpush2.msra.mxu0 0.0
    %634 = vmatprep.subr.mxu0 0.0
    %635 = vmatpush2.msra.mxu0 0.0
    %636 = vmatprep.subr.mxu0 0.0
    %637 = vmatpush2.msra.mxu0 0.0
    %638 = vmatprep.subr.mxu0 0.0
    %639 = vmatpush2.msra.mxu0 0.0
    %640 = vmatprep.subr.mxu0 0.0
    %641 = vmatpush2.msra.mxu0 0.0
    %642 = vmatprep.subr.mxu0 0.0
    %643 = vmatpush2.msra.mxu0 0.0
    %644 = vmatprep.subr.mxu0 0.0
    %645 = vmatpush2.msra.mxu0 0.0
    %646 = vmatprep.mubr.f32.mxu0 0.0
    %647 = vmatmul.mubr.f32.gmra.mxu0 %v281
    %v648 = vpop.f32.mrf.mxu0
    %v649 = vadd.f32 0.0, %v648
    %v650 = vpop.f32.mrf.mxu0
    %651 = vdwg.mxu0
    %652 = vmatprep.subr.mxu0 0.0
    %653 = vmatpush1.msra.mxu0 0.0
    %654 = vmatprep.subr.mxu0 0.0
    %655 = vmatpush1.msra.mxu0 0.0
    %656 = vmatprep.subr.mxu0 0.0
    %657 = vmatpush1.msra.mxu0 0.0
    %658 = vmatprep.subr.mxu0 0.0
    %659 = vmatpush1.msra.mxu0 0.0
    %660 = vmatprep.subr.mxu0 0.0
    %661 = vmatpush1.msra.mxu0 0.0
    %662 = vmatprep.subr.mxu0 0.0
    %663 = vmatpush1.msra.mxu0 0.0
    %664 = vmatprep.subr.mxu0 0.0
    %665 = vmatpush1.msra.mxu0 0.0
    %666 = vmatprep.subr.mxu0 0.0
    %667 = vmatpush1.msra.mxu0 0.0
    %668 = vmatprep.subr.mxu0 0.0
    %669 = vmatpush1.msra.mxu0 0.0
    %670 = vmatprep.subr.mxu0 0.0
    %671 = vmatpush1.msra.mxu0 0.0
    %672 = vmatprep.subr.mxu0 0.0
    %673 = vmatpush1.msra.mxu0 0.0
    %674 = vmatprep.subr.mxu0 0.0
    %675 = vmatpush1.msra.mxu0 0.0
    %676 = vmatprep.subr.mxu0 0.0
    %677 = vmatpush1.msra.mxu0 %v441
    %678 = vmatprep.subr.mxu0 0.0
    %679 = vmatpush1.msra.mxu0 %v440
    %680 = vmatprep.subr.mxu0 0.0
    %681 = vmatpush1.msra.mxu0 %v439
    %682 = vmatprep.subr.mxu0 0.0
    %683 = vmatpush1.msra.mxu0 %v438
    %684 = vmatprep.subr.mxu0 0.0
    %685 = vmatpush2.msra.mxu0 0.0
    %686 = vmatprep.subr.mxu0 0.0
    %687 = vmatpush2.msra.mxu0 0.0
    %688 = vmatprep.subr.mxu0 0.0
    %689 = vmatpush2.msra.mxu0 0.0
    %690 = vmatprep.subr.mxu0 0.0
    %691 = vmatpush2.msra.mxu0 0.0
    %692 = vmatprep.subr.mxu0 0.0
    %693 = vmatpush2.msra.mxu0 0.0
    %694 = vmatprep.subr.mxu0 0.0
    %695 = vmatpush2.msra.mxu0 0.0
    %696 = vmatprep.subr.mxu0 0.0
    %697 = vmatpush2.msra.mxu0 0.0
    %698 = vmatprep.subr.mxu0 0.0
    %699 = vmatpush2.msra.mxu0 0.0
    %700 = vmatprep.subr.mxu0 0.0
    %701 = vmatpush2.msra.mxu0 0.0
    %702 = vmatprep.subr.mxu0 0.0
    %703 = vmatpush2.msra.mxu0 0.0
    %704 = vmatprep.subr.mxu0 0.0
    %705 = vmatpush2.msra.mxu0 0.0
    %706 = vmatprep.subr.mxu0 0.0
    %707 = vmatpush2.msra.mxu0 0.0
    %708 = vmatprep.subr.mxu0 0.0
    %709 = vmatpush2.msra.mxu0 0.0
    %710 = vmatprep.subr.mxu0 0.0
    %711 = vmatpush2.msra.mxu0 0.0
    %712 = vmatprep.subr.mxu0 0.0
    %713 = vmatpush2.msra.mxu0 0.0
    %714 = vmatprep.subr.mxu0 0.0
    %715 = vmatpush2.msra.mxu0 0.0
    %716 = vmatprep.mubr.f32.mxu0 0.0
    %717 = vmatmul.mubr.f32.gmra.mxu0 %v354
    %v718 = vpop.f32.mrf.mxu0
    %v719 = vadd.f32 0.0, %v718
    %v720 = vpop.f32.mrf.mxu0
    %721 = vdwg.mxu0
    %v722 = vld [vmem:[#allocation8] sm:$0xff]
    %v723 = vld [vmem:[#allocation8 + $0x8] sm:$0xff]
    %v724 = vld [vmem:[#allocation8 + $0x10] sm:$0xff]
    %v725 = vld [vmem:[#allocation8 + $0x18] sm:$0xff]
    %v730 = vcombine.low %v204, %v277
    %v731 = vcombine.low %v350, %v423
    %v732 = vsel %vm133, %v730, 0
    %v734 = vsel %vm133, %v731, 0
    %736 = vmatprep.subr.mxu0 0.0
    %737 = vmatpush1.msra.mxu0 0.0
    %738 = vmatprep.subr.mxu0 0.0
    %739 = vmatpush1.msra.mxu0 0.0
    %740 = vmatprep.subr.mxu0 0.0
    %741 = vmatpush1.msra.mxu0 0.0
    %742 = vmatprep.subr.mxu0 0.0
    %743 = vmatpush1.msra.mxu0 0.0
    %744 = vmatprep.subr.mxu0 0.0
    %745 = vmatpush1.msra.mxu0 0.0
    %746 = vmatprep.subr.mxu0 0.0
    %747 = vmatpush1.msra.mxu0 0.0
    %748 = vmatprep.subr.mxu0 0.0
    %749 = vmatpush1.msra.mxu0 0.0
    %750 = vmatprep.subr.mxu0 0.0
    %751 = vmatpush1.msra.mxu0 0.0
    %752 = vmatprep.subr.mxu0 0.0
    %753 = vmatpush1.msra.mxu0 0.0
    %754 = vmatprep.subr.mxu0 0.0
    %755 = vmatpush1.msra.mxu0 0.0
    %756 = vmatprep.subr.mxu0 0.0
    %757 = vmatpush1.msra.mxu0 0.0
    %758 = vmatprep.subr.mxu0 0.0
    %759 = vmatpush1.msra.mxu0 0.0
    %760 = vmatprep.subr.mxu0 0.0
    %761 = vmatpush1.msra.mxu0 %v725
    %762 = vmatprep.subr.mxu0 0.0
    %763 = vmatpush1.msra.mxu0 %v724
    %764 = vmatprep.subr.mxu0 0.0
    %765 = vmatpush1.msra.mxu0 %v723
    %766 = vmatprep.subr.mxu0 0.0
    %767 = vmatpush1.msra.mxu0 %v722
    %768 = vmatprep.subr.mxu0 0.0
    %769 = vmatpush2.msra.mxu0 0.0
    %770 = vmatprep.subr.mxu0 0.0
    %771 = vmatpush2.msra.mxu0 0.0
    %772 = vmatprep.subr.mxu0 0.0
    %773 = vmatpush2.msra.mxu0 0.0
    %774 = vmatprep.subr.mxu0 0.0
    %775 = vmatpush2.msra.mxu0 0.0
    %776 = vmatprep.subr.mxu0 0.0
    %777 = vmatpush2.msra.mxu0 0.0
    %778 = vmatprep.subr.mxu0 0.0
    %779 = vmatpush2.msra.mxu0 0.0
    %780 = vmatprep.subr.mxu0 0.0
    %781 = vmatpush2.msra.mxu0 0.0
    %782 = vmatprep.subr.mxu0 0.0
    %783 = vmatpush2.msra.mxu0 0.0
    %784 = vmatprep.subr.mxu0 0.0
    %785 = vmatpush2.msra.mxu0 0.0
    %786 = vmatprep.subr.mxu0 0.0
    %787 = vmatpush2.msra.mxu0 0.0
    %788 = vmatprep.subr.mxu0 0.0
    %789 = vmatpush2.msra.mxu0 0.0
    %790 = vmatprep.subr.mxu0 0.0
    %791 = vmatpush2.msra.mxu0 0.0
    %792 = vmatprep.subr.mxu0 0.0
    %793 = vmatpush2.msra.mxu0 0.0
    %794 = vmatprep.subr.mxu0 0.0
    %795 = vmatpush2.msra.mxu0 0.0
    %796 = vmatprep.subr.mxu0 0.0
    %797 = vmatpush2.msra.mxu0 0.0
    %798 = vmatprep.subr.mxu0 0.0
    %799 = vmatpush2.msra.mxu0 0.0
    %800 = vmatprep.mubr.f32.mxu0 0.0
    %801 = vmatmul.mubr.f32.gmra.mxu0 %v732
    %v802 = vpop.f32.mrf.mxu0
    %v803 = vadd.f32 0.0, %v802
    %v804 = vpop.f32.mrf.mxu0
    %805 = vmatprep.mubr.f32.mxu0 0.0
    %806 = vmatmul.mubr.f32.gmra.mxu0 %v734
    %v807 = vpop.f32.mrf.mxu0
    %v808 = vadd.f32 0.0, %v807
    %v809 = vpop.f32.mrf.mxu0
    %810 = vdwg.mxu0
    %v813 = vcombine.high %v803, %v803
    %v814 = vcombine.high %v808, %v808
    %v821 = vcombine.low %v509, %v579
    %v822 = vcombine.low %v649, %v719
    %v823 = vsel %vm133, %v821, 0
    %v825 = vsel %vm133, %v822, 0
    %827 = vmatprep.subr.mxu0 0.0
    %828 = vmatpush1.msra.mxu0 0.0
    %829 = vmatprep.subr.mxu0 0.0
    %830 = vmatpush1.msra.mxu0 0.0
    %831 = vmatprep.subr.mxu0 0.0
    %832 = vmatpush1.msra.mxu0 0.0
    %833 = vmatprep.subr.mxu0 0.0
    %834 = vmatpush1.msra.mxu0 0.0
    %835 = vmatprep.subr.mxu0 0.0
    %836 = vmatpush1.msra.mxu0 0.0
    %837 = vmatprep.subr.mxu0 0.0
    %838 = vmatpush1.msra.mxu0 0.0
    %839 = vmatprep.subr.mxu0 0.0
    %840 = vmatpush1.msra.mxu0 0.0
    %841 = vmatprep.subr.mxu0 0.0
    %842 = vmatpush1.msra.mxu0 0.0
    %843 = vmatprep.subr.mxu0 0.0
    %844 = vmatpush1.msra.mxu0 0.0
    %845 = vmatprep.subr.mxu0 0.0
    %846 = vmatpush1.msra.mxu0 0.0
    %847 = vmatprep.subr.mxu0 0.0
    %848 = vmatpush1.msra.mxu0 0.0
    %849 = vmatprep.subr.mxu0 0.0
    %850 = vmatpush1.msra.mxu0 0.0
    %851 = vmatprep.subr.mxu0 0.0
    %852 = vmatpush1.msra.mxu0 %v725
    %853 = vmatprep.subr.mxu0 0.0
    %854 = vmatpush1.msra.mxu0 %v724
    %855 = vmatprep.subr.mxu0 0.0
    %856 = vmatpush1.msra.mxu0 %v723
    %857 = vmatprep.subr.mxu0 0.0
    %858 = vmatpush1.msra.mxu0 %v722
    %859 = vmatprep.subr.mxu0 0.0
    %860 = vmatpush2.msra.mxu0 0.0
    %861 = vmatprep.subr.mxu0 0.0
    %862 = vmatpush2.msra.mxu0 0.0
    %863 = vmatprep.subr.mxu0 0.0
    %864 = vmatpush2.msra.mxu0 0.0
    %865 = vmatprep.subr.mxu0 0.0
    %866 = vmatpush2.msra.mxu0 0.0
    %867 = vmatprep.subr.mxu0 0.0
    %868 = vmatpush2.msra.mxu0 0.0
    %869 = vmatprep.subr.mxu0 0.0
    %870 = vmatpush2.msra.mxu0 0.0
    %871 = vmatprep.subr.mxu0 0.0
    %872 = vmatpush2.msra.mxu0 0.0
    %873 = vmatprep.subr.mxu0 0.0
    %874 = vmatpush2.msra.mxu0 0.0
    %875 = vmatprep.subr.mxu0 0.0
    %876 = vmatpush2.msra.mxu0 0.0
    %877 = vmatprep.subr.mxu0 0.0
    %878 = vmatpush2.msra.mxu0 0.0
    %879 = vmatprep.subr.mxu0 0.0
    %880 = vmatpush2.msra.mxu0 0.0
    %881 = vmatprep.subr.mxu0 0.0
    %882 = vmatpush2.msra.mxu0 0.0
    %883 = vmatprep.subr.mxu0 0.0
    %884 = vmatpush2.msra.mxu0 0.0
    %885 = vmatprep.subr.mxu0 0.0
    %886 = vmatpush2.msra.mxu0 0.0
    %887 = vmatprep.subr.mxu0 0.0
    %888 = vmatpush2.msra.mxu0 0.0
    %889 = vmatprep.subr.mxu0 0.0
    %890 = vmatpush2.msra.mxu0 0.0
    %891 = vmatprep.mubr.f32.mxu0 0.0
    %892 = vmatmul.mubr.f32.gmra.mxu0 %v823
    %v893 = vpop.f32.mrf.mxu0
    %v894 = vadd.f32 0.0, %v893
    %v895 = vpop.f32.mrf.mxu0
    %896 = vmatprep.mubr.f32.mxu0 0.0
    %897 = vmatmul.mubr.f32.gmra.mxu0 %v825
    %v898 = vpop.f32.mrf.mxu0
    %v899 = vadd.f32 0.0, %v898
    %v900 = vpop.f32.mrf.mxu0
    %901 = vdwg.mxu0
    %v904 = vcombine.high %v894, %v894
    %v905 = vcombine.high %v899, %v899
    %v908 = vld [vmem:[%s4] sm:$0xf]
    %v911 = vunpack.c.l.s4 1966171168
    %v912 = vunpack.c.0.s8 %v911
    %v913 = vlaneseq
    %v914 = vshrl.u32 %v913, 7
    %v915 = vsub.s32 %v912, %v914
    %v916 = vrot.slane %v908, %v915
    %v917 = vcombine.high %v916, %v916
    %v919 = vunpack.c.l.s4 1966171168
    %v920 = vunpack.c.0.s8 %v919
    %v921 = vlaneseq
    %v922 = vshrl.u32 %v921, 7
    %v923 = vsub.s32 %v920, %v922
    %v924 = vrot.slane %v916, %v923
    %v926 = vunpack.c.l.s4 1966171168
    %v927 = vunpack.c.0.s8 %v926
    %v928 = vlaneseq
    %v929 = vshrl.u32 %v928, 7
    %v930 = vsub.s32 %v927, %v929
    %v931 = vrot.slane %v917, %v930
    %v932 = vcombine.high %v924, %v924
    %v933 = vcombine.high %v931, %v931
    %v934 = vlaneseq
    %v935 = vshrl.u32 %v934, 7
    %v936 = vsub.s32 0, %v935
    %v937 = vrot.slane %v924, %v936
    %v938 = vlaneseq
    %v939 = vshrl.u32 %v938, 7
    %v940 = vsub.s32 0, %v939
    %v941 = vrot.slane %v931, %v940
    %v942 = vlaneseq
    %v943 = vshrl.u32 %v942, 7
    %v944 = vsub.s32 0, %v943
    %v945 = vrot.slane %v932, %v944
    %v946 = vlaneseq
    %v947 = vshrl.u32 %v946, 7
    %v948 = vsub.s32 0, %v947
    %v949 = vrot.slane %v933, %v948
    %v954 = vadd.f32 %v803, %v937
    %v955 = vadd.f32 %v813, %v941
    %v956 = vadd.f32 %v808, %v945
    %v957 = vadd.f32 %v814, %v949
    %v958 = vmul.f32 %v954, 0.5
    %v959 = vmul.f32 %v955, 0.5
    %v960 = vmul.f32 %v956, 0.5
    %v961 = vmul.f32 %v957, 0.5
    %v962 = vmul.f32 %v954, 0.044715
    %v963 = vmul.f32 %v955, 0.044715
    %v964 = vmul.f32 %v956, 0.044715
    %v965 = vmul.f32 %v957, 0.044715
    %v966 = vmul.f32 %v962, %v954
    %v967 = vmul.f32 %v963, %v955
    %v968 = vmul.f32 %v964, %v956
    %v969 = vmul.f32 %v965, %v957
    %v970 = vmul.f32 %v966, %v954
    %v971 = vmul.f32 %v967, %v955
    %v972 = vmul.f32 %v968, %v956
    %v973 = vmul.f32 %v969, %v957
    %v974 = vadd.f32 %v954, %v970
    %v975 = vadd.f32 %v955, %v971
    %v976 = vadd.f32 %v956, %v972
    %v977 = vadd.f32 %v957, %v973
    %v978 = vmul.f32 %v974, 0.7978846
    %v979 = vmul.f32 %v975, 0.7978846
    %v980 = vmul.f32 %v976, 0.7978846
    %v981 = vmul.f32 %v977, 0.7978846
    %v982 = vtanh.pop %v978
    %v983 = vtanh.pop %v979
    %v984 = vtanh.pop %v980
    %v985 = vtanh.pop %v981
    %v986 = vadd.f32 %v982, 1.0
    %v987 = vadd.f32 %v983, 1.0
    %v988 = vadd.f32 %v984, 1.0
    %v989 = vadd.f32 %v985, 1.0
    %v990 = vmul.f32 %v958, %v986
    %v991 = vmul.f32 %v959, %v987
    %v992 = vmul.f32 %v960, %v988
    %v993 = vmul.f32 %v961, %v989
    %vm994 = vcmask 257024
    %995 = vst.msk [vmem:[#allocation10] sm:$0xf] %vm994, %v990
    %996 = vst.msk [vmem:[#allocation10 + $0x4] sm:$0xf] %vm994, %v991
    %997 = vst.msk [vmem:[#allocation10 + $0x8] sm:$0xf] %vm994, %v992
    %998 = vst.msk [vmem:[#allocation10 + $0xc] sm:$0xf] %vm994, %v993
    %v999 = vmul.f32 %v894, 0.5
    %v1000 = vmul.f32 %v904, 0.5
    %v1001 = vmul.f32 %v899, 0.5
    %v1002 = vmul.f32 %v905, 0.5
    %v1003 = vmul.f32 %v894, 0.044715
    %v1004 = vmul.f32 %v904, 0.044715
    %v1005 = vmul.f32 %v899, 0.044715
    %v1006 = vmul.f32 %v905, 0.044715
    %v1007 = vmul.f32 %v1003, %v894
    %v1008 = vmul.f32 %v1004, %v904
    %v1009 = vmul.f32 %v1005, %v899
    %v1010 = vmul.f32 %v1006, %v905
    %v1011 = vmul.f32 %v1007, %v894
    %v1012 = vmul.f32 %v1008, %v904
    %v1013 = vmul.f32 %v1009, %v899
    %v1014 = vmul.f32 %v1010, %v905
    %v1015 = vadd.f32 %v894, %v1011
    %v1016 = vadd.f32 %v904, %v1012
    %v1017 = vadd.f32 %v899, %v1013
    %v1018 = vadd.f32 %v905, %v1014
    %v1019 = vmul.f32 %v1015, 0.7978846
    %v1020 = vmul.f32 %v1016, 0.7978846
    %v1021 = vmul.f32 %v1017, 0.7978846
    %v1022 = vmul.f32 %v1018, 0.7978846
    %v1023 = vtanh.pop %v1019
    %v1024 = vtanh.pop %v1020
    %v1025 = vtanh.pop %v1021
    %v1026 = vtanh.pop %v1022
    %v1027 = vadd.f32 %v1023, 1.0
    %v1028 = vadd.f32 %v1024, 1.0
    %v1029 = vadd.f32 %v1025, 1.0
    %v1030 = vadd.f32 %v1026, 1.0
    %v1031 = vmul.f32 %v999, %v1027
    %v1032 = vmul.f32 %v1000, %v1028
    %v1033 = vmul.f32 %v1001, %v1029
    %v1034 = vmul.f32 %v1002, %v1030
    %1035 = vst.msk [vmem:[#allocation11] sm:$0xf] %vm994, %v1031
    %1036 = vst.msk [vmem:[#allocation11 + $0x4] sm:$0xf] %vm994, %v1032
    %1037 = vst.msk [vmem:[#allocation11 + $0x8] sm:$0xf] %vm994, %v1033
    %1038 = vst.msk [vmem:[#allocation11 + $0xc] sm:$0xf] %vm994, %v1034
    // Predicated region
    $region38: #{tpu_custom_call.1} parent=1 // pred_check
      _
    $region39: #{tpu_custom_call.1} parent=1 // pred_check_branch
      %1040 = sbr.rel (0) target = $region41
    $region40: #{tpu_custom_call.1} parent=1 // pred_region
      %s1042 = ssub.s32 256, 256
      %1043 = vsyncadd [#allocation4], %s1042
      %s1044 = sshll.u32 [#allocation10], 4
      %s1045 = int_to_ptr.vmem [resolvable:$true] %s1044
      %1050 = dma.vmem_to_hbm [thread:$0]  %s1045, 256, %s5, [#allocation4], 64, 64, 4
    $region41: #{tpu_custom_call.1} parent=1 // pred_fallthru
      _
    // Predicated region
    $region42: #{tpu_custom_call.1} parent=1 // pred_check
      _
    $region43: #{tpu_custom_call.1} parent=1 // pred_check_branch
      %1052 = sbr.rel (0) target = $region45
    $region44: #{tpu_custom_call.1} parent=1 // pred_region
      %s1054 = ssub.s32 256, 256
      %1055 = vsyncadd [#allocation12], %s1054
      %s1056 = sshll.u32 [#allocation11], 4
      %s1057 = int_to_ptr.vmem [resolvable:$true] %s1056
      %1062 = dma.vmem_to_hbm [thread:$0]  %s1057, 256, %s6, [#allocation12], 64, 64, 4
    $region45: #{tpu_custom_call.1} parent=1 // pred_fallthru
      _
    // Predicated region
    $region46: #{tpu_custom_call.1} parent=1 // pred_check
      _
    $region47: #{tpu_custom_call.1} parent=1 // pred_check_branch
      %1064 = sbr.rel (0) target = $region49
    $region48: #{tpu_custom_call.1} parent=1 // pred_region
      %1065 = dma.done [#allocation4], 256
    $region49: #{tpu_custom_call.1} parent=1 // pred_fallthru
      _
    // Predicated region
    $region50: #{tpu_custom_call.1} parent=1 // pred_check
      _
    $region51: #{tpu_custom_call.1} parent=1 // pred_check_branch
      %1067 = sbr.rel (0) target = $region53
    $region52: #{tpu_custom_call.1} parent=1 // pred_region
      %1068 = dma.done [#allocation12], 256
    $region53: #{tpu_custom_call.1} parent=1 // pred_fallthru
      _
    %1069 = vsyncpa [#allocation3], 1
    %1070 = vsyncpa [#allocation6], 1
    %1071 = vsyncpa [#allocation9], 1
    %1072 = vsyncpa [#allocation4], 1
    %1073 = vsyncpa [#allocation12], 1

</llo_original>
